<compile_context>
chip_gen: v7x
topology: tpu7x:2x2x1
jax: 0.10.0
libtpu: 0.0.40
codegen_flags: <defaults>
</compile_context>

<pallas_src>
import functools

import jax
import jax.numpy as jnp
from jax.experimental import pallas as pl
from jax.experimental.pallas import tpu as pltpu


_ROW_MULT = 32   # row-block granularity: covers sublane packing for f32/bf16/int8
_ACC_ROWS = 32   # 4 f32 vregs of independent accumulation chains


def _vmem_cap_bytes():
    """Generation-aware scoped-VMEM cap: 3/4 of physical, safe fallback."""
    try:
        cap = int(pltpu.get_tpu_info().vmem_capacity_bytes)
        return max((cap * 3) // 4, 32 << 20)
    except Exception:
        return 48 << 20  # v7x-safe (64 MiB / TC)


def _bce_partial_kernel(pred_ref, tar_ref, out_ref, *, n_rows, block_rows,
                        acc_rows, tiles_per_slice, tiles_total, needs_mask,
                        binary_targets):
    """Accumulate the sum of per-element log terms.

    out_ref is a (1, acc_rows, n_cols) f32 block whose index depends only on
    the leading (partial-slice) grid axis, so it stays VMEM-resident across
    the whole reduction axis.  Final loss = -sum(out) / N outside the kernel.
    """
    p = pl.program_id(0)
    t = pl.program_id(1)

    @pl.when(t == 0)
    def _():
        out_ref[...] = jnp.zeros_like(out_ref)

    pv = pred_ref[...].astype(jnp.float32)
    tv = tar_ref[...].astype(jnp.float32)

    if binary_targets:
        # One log per element: select p or 1-p by the {0,1} target.
        ell = jnp.maximum(jnp.log(jnp.where(tv > 0.5, pv, 1.0 - pv)), -100.0)
    else:
        # General (fractional-target) BCE; torch clamps each log at -100.
        lp = jnp.maximum(jnp.log(pv), -100.0)
        l1 = jnp.maximum(jnp.log(1.0 - pv), -100.0)
        ell = l1 + tv * (lp - l1)

    groups = block_rows // acc_rows

    def accumulate(x):
        if groups > 1:
            # Fold (block_rows, C) -> (acc_rows, C): pure VPU adds into
            # several independent accumulator rows (no serial vreg chain).
            x = x.reshape(groups, acc_rows, x.shape[-1]).sum(axis=0)
        out_ref[...] += x[None]

    if needs_mask:
        g = p * tiles_per_slice + t          # unclamped global tile index
        last = tiles_total - 1

        @pl.when(g < last)
        def _():
            accumulate(ell)                  # steady state: no mask work

        @pl.when(g >= last)
        def _():
            # Last real tile (ragged rows) and phantom tiles (odd tile count
            # split over two slices): zero rows past the real extent.
            # jnp.where is a select, so pipeline-padding garbage cannot leak.
            row_ids = g * block_rows + jax.lax.broadcasted_iota(
                jnp.int32, ell.shape, 0)
            accumulate(jnp.where(row_ids < n_rows, ell, 0.0))
    else:
        accumulate(ell)


def my_loss(pred1, tar1, *, binary_targets=False, target_block_bytes=8 << 20):
    """Mean binary cross entropy, matching F.binary_cross_entropy."""
    assert pred1.shape == tar1.shape, (pred1.shape, tar1.shape)
    n_elems = int(pred1.size)

    pred_flat = pred1.reshape(-1)
    tar_flat = tar1.reshape(-1)

    # --- Lane-dense reshape: largest C <= 1024 (multiple of 128) dividing the
    # element count -> free bitcast reshape, full lane/sublane utilisation.
    n_cols = None
    for c in range(1024, 127, -128):
        if n_elems % c == 0:
            n_cols = c
            break
    if n_cols is None:
        # Awkward size: pad with (pred=1, tar=1) which contributes exactly 0
        # to the loss sum on both code paths (no extra mask needed).
        n_cols = 1024 if n_elems >= 1024 else 128
        pad = (-n_elems) % n_cols
        pred_flat = jnp.pad(pred_flat, (0, pad), constant_values=1)
        tar_flat = jnp.pad(tar_flat, (0, pad), constant_values=1)
    n_rows = int(pred_flat.size) // n_cols
    pred2 = pred_flat.reshape(n_rows, n_cols)
    tar2 = tar_flat.reshape(n_rows, n_cols)

    itemsize = max(jnp.dtype(pred2.dtype).itemsize,
                   jnp.dtype(tar2.dtype).itemsize)
    vmem_cap = _vmem_cap_bytes()

    # --- Row-block selection: ~8 MiB per input per step (amortises the
    # ~0.35us per-step overhead), rounded to a multiple of 32 rows.
    block_rows = (target_block_bytes // (n_cols * itemsize)) // _ROW_MULT * _ROW_MULT
    block_rows = max(block_rows, _ROW_MULT)

    def vmem_needed(br):
        # 2 inputs x 2 pipeline buffers + double-buffered accumulator + slack.
        return 4 * br * n_cols * itemsize + 2 * _ACC_ROWS * n_cols * 4 + (4 << 20)

    while block_rows > _ROW_MULT and vmem_needed(block_rows) > vmem_cap:
        block_rows = max(_ROW_MULT, (block_rows // 2) // _ROW_MULT * _ROW_MULT)

    if block_rows >= n_rows:
        block_rows = n_rows              # single full-extent tile

    if block_rows % _ACC_ROWS == 0:
        acc_rows = _ACC_ROWS
    elif block_rows % 8 == 0:
        acc_rows = 8
    else:
        acc_rows = block_rows            # tiny full-extent block: no fold

    tiles_total = (n_rows + block_rows - 1) // block_rows
    # Always split the tiles over two partial slices when there is more than
    # one tile, so v7x's two TensorCores both get work (no-op on v5e/v6e).
    num_partials = 2 if tiles_total >= 2 else 1
    tiles_per_slice = (tiles_total + num_partials - 1) // num_partials
    has_phantom = num_partials * tiles_per_slice > tiles_total
    needs_mask = has_phantom or (n_rows % block_rows != 0)

    if has_phantom:
        # Clamp keeps the phantom step's DMA in-bounds; its contribution is
        # fully masked inside the kernel.
        in_map = lambda p, t: (jnp.minimum(p * tiles_per_slice + t,
                                           tiles_total - 1), 0)
    else:
        in_map = lambda p, t: (p * tiles_per_slice + t, 0)

    kernel = functools.partial(
        _bce_partial_kernel,
        n_rows=n_rows, block_rows=block_rows, acc_rows=acc_rows,
        tiles_per_slice=tiles_per_slice, tiles_total=tiles_total,
        needs_mask=needs_mask, binary_targets=binary_targets)

    vmem_limit = int(min(vmem_cap, max(32 << 20, vmem_needed(block_rows))))

    # TODO(synk): if a trace shows exposed DMA at step boundaries, sweep
    # pipeline_mode=pl.Buffered(3) on the two input BlockSpecs (VMEM allows).
    partials = pl.pallas_call(
        kernel,
        out_shape=jax.ShapeDtypeStruct((num_partials, acc_rows, n_cols),
                                       jnp.float32),
        grid_spec=pltpu.PrefetchScalarGridSpec(
            num_scalar_prefetch=0,
            grid=(num_partials, tiles_per_slice),
            in_specs=[
                pl.BlockSpec((block_rows, n_cols), in_map),
                pl.BlockSpec((block_rows, n_cols), in_map),
            ],
            out_specs=pl.BlockSpec((1, acc_rows, n_cols),
                                   lambda p, t: (p, 0, 0)),
        ),
        compiler_params=pltpu.CompilerParams(
            # NOTE: on v7x pltpu.CORE_PARALLEL on the leading axis is worth a
            # sweep; "parallel" is the portable choice across 1-TC parts.
            dimension_semantics=("parallel", "arbitrary"),
            vmem_limit_bytes=vmem_limit,
        ),
    )(pred2, tar2)

    # Single cheap cross-lane reduce; the negation is folded into the scale.
    return jnp.sum(partials) * (jnp.float32(-1.0) / jnp.float32(n_elems))


if __name__ == "__main__":
    key = jax.random.PRNGKey(0)
    ks = jax.random.split(key, 8)

    def ref_bce(pred, tar):
        lp = jnp.maximum(jnp.log(pred), -100.0)
        l1 = jnp.maximum(jnp.log(1.0 - pred), -100.0)
        return jnp.mean(-(tar * lp + (1.0 - tar) * l1))

    # Case 1: small 2-D input, binary targets (single-log fast path),
    # single full-extent tile.
    pred1 = jax.nn.sigmoid(jax.random.normal(ks[0], (32, 128), jnp.float32))
    tar1 = jax.random.bernoulli(ks[1], 0.5, (32, 128)).astype(jnp.float32)
    out1 = my_loss(pred1, tar1, binary_targets=True)
    jax.block_until_ready(out1)
    ref1 = ref_bce(pred1, tar1)
    assert jnp.allclose(out1, ref1, atol=1e-5, rtol=1e-4), (out1, ref1)

    # Case 2: multi-tile + ragged tail + two partial slices, fractional
    # targets (general two-log path).  Small forced block exercises masking.
    pred2 = jax.nn.sigmoid(jax.random.normal(ks[2], (1000, 128), jnp.float32))
    tar2 = jax.random.uniform(ks[3], (1000, 128), jnp.float32)
    out2 = my_loss(pred2, tar2, target_block_bytes=128 * 1024)
    jax.block_until_ready(out2)
    ref2 = ref_bce(pred2, tar2)
    assert jnp.allclose(out2, ref2, atol=1e-5, rtol=1e-4), (out2, ref2)

    # Case 3: 3-D input, odd tile count -> clamped phantom tile on slice 1.
    pred3 = jax.nn.sigmoid(jax.random.normal(ks[4], (3, 24, 1024), jnp.float32))
    tar3 = jax.random.bernoulli(ks[5], 0.3, (3, 24, 1024)).astype(jnp.float32)
    out3 = my_loss(pred3, tar3, binary_targets=True,
                   target_block_bytes=128 * 1024)
    jax.block_until_ready(out3)
    ref3 = ref_bce(pred3, tar3)
    assert jnp.allclose(out3, ref3, atol=1e-5, rtol=1e-4), (out3, ref3)

    # Case 4: awkward element count -> zero-loss padding fallback path.
    pred4 = jax.nn.sigmoid(jax.random.normal(ks[6], (7, 130), jnp.float32))
    tar4 = jax.random.uniform(ks[7], (7, 130), jnp.float32)
    out4 = my_loss(pred4, tar4)
    jax.block_until_ready(out4)
    ref4 = ref_bce(pred4, tar4)
    assert jnp.allclose(out4, ref4, atol=1e-5, rtol=1e-4), (out4, ref4)

    print("KERNEL_OK")
</pallas_src>

<mosaic_0001>
module attributes {stable_mosaic.version = 11 : i64} {
  func.func @_bce_partial_kernel(%arg0: i32, %arg1: i32, %arg2: memref<4x1024xf32, #tpu.memory_space<vmem>>, %arg3: memref<4x1024xf32, #tpu.memory_space<vmem>>, %arg4: memref<1x4x1024xf32, #tpu.memory_space<vmem>>) attributes {dimension_semantics = [#tpu.dimension_semantics<parallel>, #tpu.dimension_semantics<arbitrary>], iteration_bounds = array<i64: 1, 1>, scalar_prefetch = 0 : i64, scratch_operands = 0 : i64, tpu.core_type = #tpu.core_type<tc>, window_params = [{transform_indices = @transform_0, window_bounds = array<i64: 4, 1024>}, {transform_indices = @transform_1, window_bounds = array<i64: 4, 1024>}, {transform_indices = @transform_2, window_bounds = array<i64: 1, 4, 1024>}]} {
    %c0_i32 = arith.constant 0 : i32
    %0 = arith.cmpi eq, %arg1, %c0_i32 : i32
    %1 = arith.extui %0 : i1 to i32
    %c0_i32_0 = arith.constant 0 : i32
    %2 = arith.cmpi ne, %1, %c0_i32_0 : i32
    scf.if %2 {
      %cst_12 = arith.constant 0.000000e+00 : f32
      %17 = vector.broadcast %cst_12 : f32 to vector<1x4x1024xf32>
      %c0_13 = arith.constant 0 : index
      %c0_14 = arith.constant 0 : index
      %c0_15 = arith.constant 0 : index
      %18 = vector.load %arg4[%c0_13, %c0_14, %c0_15] : memref<1x4x1024xf32, #tpu.memory_space<vmem>>, vector<1x4x1024xf32>
      tpu.vector_store %arg4[%c0_13, %c0_14, %c0_15], %17 {strides = array<i32>} : memref<1x4x1024xf32, #tpu.memory_space<vmem>>, vector<1x4x1024xf32>,
    } else {
    }
    %c0 = arith.constant 0 : index
    %c0_1 = arith.constant 0 : index
    %3 = vector.load %arg2[%c0, %c0_1] : memref<4x1024xf32, #tpu.memory_space<vmem>>, vector<4x1024xf32>
    %c0_2 = arith.constant 0 : index
    %c0_3 = arith.constant 0 : index
    %4 = vector.load %arg3[%c0_2, %c0_3] : memref<4x1024xf32, #tpu.memory_space<vmem>>, vector<4x1024xf32>
    %cst = arith.constant 5.000000e-01 : f32
    %5 = vector.broadcast %cst : f32 to vector<4x1024xf32>
    %6 = arith.cmpf ogt, %4, %5 : vector<4x1024xf32>
    %cst_4 = arith.constant 1.000000e+00 : f32
    %7 = vector.broadcast %cst_4 : f32 to vector<4x1024xf32>
    %8 = arith.subf %7, %3 : vector<4x1024xf32>
    %9 = arith.select %6, %3, %8 : vector<4x1024xi1>, vector<4x1024xf32>
    %10 = math.log %9 : vector<4x1024xf32>
    %cst_5 = arith.constant -1.000000e+02 : f32
    %11 = vector.broadcast %cst_5 : f32 to vector<4x1024xf32>
    %12 = arith.maximumf %10, %11 : vector<4x1024xf32>
    %c0_6 = arith.constant 0 : index
    %c0_7 = arith.constant 0 : index
    %c0_8 = arith.constant 0 : index
    %13 = vector.load %arg4[%c0_6, %c0_7, %c0_8] : memref<1x4x1024xf32, #tpu.memory_space<vmem>>, vector<1x4x1024xf32>
    %14 = vector.shape_cast %12 : vector<4x1024xf32> to vector<1x4x1024xf32>
    %15 = arith.addf %13, %14 : vector<1x4x1024xf32>
    %c0_9 = arith.constant 0 : index
    %c0_10 = arith.constant 0 : index
    %c0_11 = arith.constant 0 : index
    %16 = vector.load %arg4[%c0_9, %c0_10, %c0_11] : memref<1x4x1024xf32, #tpu.memory_space<vmem>>, vector<1x4x1024xf32>
    tpu.vector_store %arg4[%c0_9, %c0_10, %c0_11], %15 {strides = array<i32>} : memref<1x4x1024xf32, #tpu.memory_space<vmem>>, vector<1x4x1024xf32>,
    return
  }
  func.func @transform_0(%arg0: i32, %arg1: i32) -> (i32, i32) {
    %c1_i32 = arith.constant 1 : i32
    %0 = arith.muli %arg0, %c1_i32 : i32
    %1 = arith.addi %0, %arg1 : i32
    %c0_i32 = arith.constant 0 : i32
    %c0_i32_0 = arith.constant 0 : i32
    return %1, %c0_i32 : i32, i32
  }
  func.func @transform_1(%arg0: i32, %arg1: i32) -> (i32, i32) {
    %c1_i32 = arith.constant 1 : i32
    %0 = arith.muli %arg0, %c1_i32 : i32
    %1 = arith.addi %0, %arg1 : i32
    %c0_i32 = arith.constant 0 : i32
    %c0_i32_0 = arith.constant 0 : i32
    return %1, %c0_i32 : i32, i32
  }
  func.func @transform_2(%arg0: i32, %arg1: i32) -> (i32, i32, i32) {
    %c0_i32 = arith.constant 0 : i32
    %c0_i32_0 = arith.constant 0 : i32
    %c0_i32_1 = arith.constant 0 : i32
    return %arg0, %c0_i32, %c0_i32_0 : i32, i32, i32
  }
}

</mosaic_0001>

<llo_original>
// kernel: tpu_custom_call.1
$region0: #{tpu_custom_call.1}
  #allocation0 [shape = 'u32[]', space=smem, size = 0x4, offset = 0x4, fixed_abs, tag = 'smem constant byte address 0x4 - core index']
  #allocation1 [shape = 'u32[144,128]{1,0:T(1,128)}', space=vmem, size = 0x12000, scoped, tag = 'internal scratch']
  %s0 = inlined_call_operand.hbm [shape: f32[4,1024], index: 0, kind: input, shape index: {}]
  %s1 = inlined_call_operand.hbm [shape: f32[4,1024], index: 1, kind: input, shape index: {}]
  %s2 = inlined_call_operand.hbm [shape: f32[1,4,1024], index: 2, kind: output, shape index: {}]
  %s3 = sld [smem:[#allocation0]]
  $region30: #{tpu_custom_call.1} parent=0
    _
  %s5 = ssub.s32 1, %s3
  %s6 = scalar_select 0, %s5, %s3
  $region1: #{tpu_custom_call.1} parent=0
    #allocation2 [shape = 'u8[16384]{0}', space=vmem, size = 0x4000, scoped, tag = 'input window, operand 0, single buffered']
    #allocation3 [shape = 's32[1]{0}', space=sflag, size = 0x4, scoped, tag = 'scoped memory for tpu_custom_call.1']
    #allocation4 [shape = 's32[1]{0}', space=sflag, size = 0x4, scoped, tag = 'scoped memory for tpu_custom_call.1']
    #allocation5 [shape = 'u8[16384]{0}', space=vmem, size = 0x4000, scoped, tag = 'input window, operand 1, single buffered']
    #allocation6 [shape = 's32[1]{0}', space=sflag, size = 0x4, scoped, tag = 'scoped memory for tpu_custom_call.1']
    #allocation7 [shape = 'u8[16384]{0}', space=vmem, size = 0x4000, scoped, tag = 'output window, operand 0, single buffered']
    %7 = vsyncpa [#allocation3], 0
    %8 = vsyncpa [#allocation6], 0
    %9 = vsyncpa [#allocation4], 0
    // Predicated region
    $region2: #{tpu_custom_call.1} parent=1 // pred_check
      _
    $region3: #{tpu_custom_call.1} parent=1 // pred_check_branch
      %11 = sbr.rel (0) target = $region5
    $region4: #{tpu_custom_call.1} parent=1 // pred_region
      %s12 = sadd.s32 0, 0
      %s14 = ssub.s32 512, 512
      %15 = vsyncadd [#allocation3], %s14
      %s16 = smul.addr %s12, 8
      %s17 = smul.addr %s16, 64
      %s18 = scalar_lea.hbm %s0, %s17
      %s20 = sshll.u32 [#allocation2], 4
      %s21 = int_to_ptr.vmem [resolvable:$true] %s20
      %23 = dma.hbm_to_vmem [thread:$0]  %s18, 512, %s21, [#allocation3]
    $region5: #{tpu_custom_call.1} parent=1 // pred_fallthru
      _
    // Predicated region
    $region6: #{tpu_custom_call.1} parent=1 // pred_check
      _
    $region7: #{tpu_custom_call.1} parent=1 // pred_check_branch
      %25 = sbr.rel (0) target = $region9
    $region8: #{tpu_custom_call.1} parent=1 // pred_region
      %s26 = sadd.s32 0, 0
      %s28 = ssub.s32 512, 512
      %29 = vsyncadd [#allocation6], %s28
      %s30 = smul.addr %s26, 8
      %s31 = smul.addr %s30, 64
      %s32 = scalar_lea.hbm %s1, %s31
      %s34 = sshll.u32 [#allocation5], 4
      %s35 = int_to_ptr.vmem [resolvable:$true] %s34
      %37 = dma.hbm_to_vmem [thread:$0]  %s32, 512, %s35, [#allocation6]
    $region9: #{tpu_custom_call.1} parent=1 // pred_fallthru
      _
    // Predicated region
    $region10: #{tpu_custom_call.1} parent=1 // pred_check
      _
    $region11: #{tpu_custom_call.1} parent=1 // pred_check_branch
      %39 = sbr.rel (0) target = $region13
    $region12: #{tpu_custom_call.1} parent=1 // pred_region
      %40 = dma.done [#allocation3], 512
    $region13: #{tpu_custom_call.1} parent=1 // pred_fallthru
      _
    // Predicated region
    $region14: #{tpu_custom_call.1} parent=1 // pred_check
      _
    $region15: #{tpu_custom_call.1} parent=1 // pred_check_branch
      %42 = sbr.rel (0) target = $region17
    $region16: #{tpu_custom_call.1} parent=1 // pred_region
      %43 = dma.done [#allocation6], 512
    $region17: #{tpu_custom_call.1} parent=1 // pred_fallthru
      _
    %s44 = sadd.s32 0, 0
    %s45 = sadd.s32 0, 0
    %p46 = scmp.eq.s32.totalorder 0, 0
    // Predicated region
    $region18: #{tpu_custom_call.1} parent=1 // pred_check
      %p47 = pneg %p46
    $region19: #{tpu_custom_call.1} parent=1 // pred_check_branch
      %49 = sbr.rel (%p47) target = $region21
    $region20: #{tpu_custom_call.1} parent=1 // pred_region
      %50 = vst [vmem:[#allocation7] sm:$0xff] 0.0
      %51 = vst [vmem:[#allocation7 + $0x8] sm:$0xff] 0.0
      %52 = vst [vmem:[#allocation7 + $0x10] sm:$0xff] 0.0
      %53 = vst [vmem:[#allocation7 + $0x18] sm:$0xff] 0.0
    $region21: #{tpu_custom_call.1} parent=1 // pred_fallthru
      _
    %v54 = vld [vmem:[#allocation2] sm:$0xff]
    %v55 = vld [vmem:[#allocation2 + $0x8] sm:$0xff]
    %v56 = vld [vmem:[#allocation2 + $0x10] sm:$0xff]
    %v57 = vld [vmem:[#allocation2 + $0x18] sm:$0xff]
    %v58 = vld [vmem:[#allocation5] sm:$0xff]
    %v59 = vld [vmem:[#allocation5 + $0x8] sm:$0xff]
    %v60 = vld [vmem:[#allocation5 + $0x10] sm:$0xff]
    %v61 = vld [vmem:[#allocation5 + $0x18] sm:$0xff]
    %vm62 = vcmp.gt.f32.partialorder %v58, 0.5
    %vm63 = vcmp.gt.f32.partialorder %v59, 0.5
    %vm64 = vcmp.gt.f32.partialorder %v60, 0.5
    %vm65 = vcmp.gt.f32.partialorder %v61, 0.5
    %v66 = vsub.f32 1.0, %v54
    %v67 = vsub.f32 1.0, %v55
    %v68 = vsub.f32 1.0, %v56
    %v69 = vsub.f32 1.0, %v57
    %v70 = vsel %vm62, %v54, %v66
    %v71 = vsel %vm63, %v55, %v67
    %v72 = vsel %vm64, %v56, %v68
    %v73 = vsel %vm65, %v57, %v69
    %v74 = vlog2.pop %v70
    %v75 = vmul.f32 %v74, 0.6931472
    %v76 = vlog2.pop %v71
    %v77 = vmul.f32 %v76, 0.6931472
    %v78 = vlog2.pop %v72
    %v79 = vmul.f32 %v78, 0.6931472
    %v80 = vlog2.pop %v73
    %v81 = vmul.f32 %v80, 0.6931472
    %v82 = vmax.f32 %v75, -100.0
    %v83 = vmax.f32 %v77, -100.0
    %v84 = vmax.f32 %v79, -100.0
    %v85 = vmax.f32 %v81, -100.0
    %v86 = vld [vmem:[#allocation7] sm:$0xff]
    %v87 = vld [vmem:[#allocation7 + $0x8] sm:$0xff]
    %v88 = vld [vmem:[#allocation7 + $0x10] sm:$0xff]
    %v89 = vld [vmem:[#allocation7 + $0x18] sm:$0xff]
    %v90 = vadd.f32 %v86, %v82
    %v91 = vadd.f32 %v87, %v83
    %v92 = vadd.f32 %v88, %v84
    %v93 = vadd.f32 %v89, %v85
    %94 = vst [vmem:[#allocation7] sm:$0xff] %v90
    %95 = vst [vmem:[#allocation7 + $0x8] sm:$0xff] %v91
    %96 = vst [vmem:[#allocation7 + $0x10] sm:$0xff] %v92
    %97 = vst [vmem:[#allocation7 + $0x18] sm:$0xff] %v93
    // Predicated region
    $region22: #{tpu_custom_call.1} parent=1 // pred_check
      _
    $region23: #{tpu_custom_call.1} parent=1 // pred_check_branch
      %99 = sbr.rel (0) target = $region25
    $region24: #{tpu_custom_call.1} parent=1 // pred_region
      %s101 = ssub.s32 512, 512
      %102 = vsyncadd [#allocation4], %s101
      %s104 = sshll.u32 [#allocation7], 4
      %s105 = int_to_ptr.vmem [resolvable:$true] %s104
      %107 = dma.vmem_to_hbm [thread:$0]  %s105, 512, %s2, [#allocation4]
    $region25: #{tpu_custom_call.1} parent=1 // pred_fallthru
      _
    // Predicated region
    $region26: #{tpu_custom_call.1} parent=1 // pred_check
      _
    $region27: #{tpu_custom_call.1} parent=1 // pred_check_branch
      %109 = sbr.rel (0) target = $region29
    $region28: #{tpu_custom_call.1} parent=1 // pred_region
      %110 = dma.done [#allocation4], 512
    $region29: #{tpu_custom_call.1} parent=1 // pred_fallthru
      _
    %111 = vsyncpa [#allocation3], 1
    %112 = vsyncpa [#allocation6], 1
    %113 = vsyncpa [#allocation4], 1

</llo_original>
